<compile_context>
chip_gen: v7x
topology: tpu7x:2x2x1
jax: 0.10.0
libtpu: 0.0.40
codegen_flags: <defaults>
</compile_context>

<pallas_src>
import jax
import jax.numpy as jnp
import numpy as np
from jax.experimental import pallas as pl
from jax.experimental.pallas import tpu as pltpu


def _round_up(x, m):
    return (x + m - 1) // m * m


def _patch_matmul_kernel(a_ref, w_ref, o_ref):
    # a_ref: (TM, K) patch tile; w_ref: (K, N_pad) resident weight;
    # o_ref: (TM, N_pad) lane-dense output tile.  f32 accumulation on the MXU.
    o_ref[...] = jnp.dot(
        a_ref[...], w_ref[...], preferred_element_type=jnp.float32
    ).astype(o_ref.dtype)


def _pick_tm(m, k, n_pad, bytes_a, bytes_o, *, tm_max=2048, vmem_budget=24 << 20):
    """Largest MXU-friendly M-tile whose double-buffered footprint fits VMEM."""
    per_row = 2 * k * bytes_a + 2 * n_pad * bytes_o   # dbl-buffered A + out rows
    tm = max(8, int(vmem_budget // max(per_row, 1)))
    tm = min(tm, tm_max)
    if tm >= 256:
        tm = tm // 256 * 256          # MXU-friendly multiple
    else:
        tm = max(8, tm // 8 * 8)
    tm = min(tm, _round_up(m, 8))     # never bigger than the (padded) problem
    return tm


def downsample_pallas(x, weight, scale, *, compute_dtype=jnp.bfloat16):
    """Forward of nn.Conv2d(C, C, kernel_size=scale, stride=scale, bias=False).

    x:      (N, C, H, W)           activation, NCHW (PyTorch layout)
    weight: (C_out, C_in, s, s)    conv weight (PyTorch OIHW layout)
    """
    n, c, h, w = x.shape
    c_out = weight.shape[0]
    s = scale

    # PyTorch's strided conv silently floors odd spatial dims; crop explicitly.
    ho, wo = h // s, w // s
    if (ho * s, wo * s) != (h, w):
        x = x[:, :, : ho * s, : wo * s]

    # ---- glue: space-to-depth (non-overlapping patch extraction) ----
    # Cast first so the transpose pass moves compute_dtype (half the bytes for
    # bf16).  (N,C,Ho,s,Wo,s) -> (N,Ho,Wo,C,s,s) -> (M, K), K ordered
    # (c_in, kh, kw) to match PyTorch's OIHW weight layout.
    k = c * s * s
    m = n * ho * wo
    xc = x.astype(compute_dtype)
    patches = xc.reshape(n, c, ho, s, wo, s).transpose(0, 2, 4, 1, 3, 5)
    a = patches.reshape(m, k)

    # weight (C_out, C_in, kh, kw) -> (K, C_out); zero-pad N up to a multiple
    # of 128 so the output store path is lane-dense (unmasked vst).
    n_pad = _round_up(max(c_out, 1), 128)
    w_mat = weight.reshape(c_out, k).T.astype(compute_dtype)
    w_mat = jnp.pad(w_mat, ((0, 0), (0, n_pad - c_out)))

    # ---- M-tiled, software-pipelined matmul ----
    out_dtype = x.dtype
    bytes_a = jnp.dtype(compute_dtype).itemsize
    bytes_o = jnp.dtype(out_dtype).itemsize
    tm = _pick_tm(m, k, n_pad, bytes_a, bytes_o)
    m_pad = _round_up(m, tm)
    if m_pad != m:
        a = jnp.pad(a, ((0, m_pad - m), (0, 0)))
    grid = (m_pad // tm,)

    cost = pl.CostEstimate(
        flops=2 * m_pad * k * n_pad,
        transcendentals=0,
        bytes_accessed=(
            m_pad * k * bytes_a
            + k * n_pad * bytes_a
            + m_pad * n_pad * bytes_o
        ),
    )

    out_flat = pl.pallas_call(
        _patch_matmul_kernel,
        out_shape=jax.ShapeDtypeStruct((m_pad, n_pad), out_dtype),
        grid=grid,
        in_specs=[
            pl.BlockSpec((tm, k), lambda i: (i, 0)),        # A: tiled over M
            pl.BlockSpec((k, n_pad), lambda i: (0, 0)),     # W: resident, tiny
        ],
        out_specs=pl.BlockSpec((tm, n_pad), lambda i: (i, 0)),
        compiler_params=pltpu.CompilerParams(
            dimension_semantics=("parallel",),              # megacore sharding
            vmem_limit_bytes=32 * 1024 * 1024,              # safe on v5e/v6e/v7x
        ),
        cost_estimate=cost,
    )(a, w_mat)

    # ---- glue: drop padding, back to NCHW ----
    out = out_flat[:m, :c_out].reshape(n, ho, wo, c_out).transpose(0, 3, 1, 2)
    return out


if __name__ == "__main__":
    n_feat = 4
    scale = 2
    batch, h, w = 2, 16, 16

    key = jax.random.PRNGKey(0)
    kx, kw_ = jax.random.split(key)
    x = jax.random.normal(kx, (batch, n_feat, h, w), dtype=jnp.float32)
    weight = jax.random.normal(
        kw_, (n_feat, n_feat, scale, scale), dtype=jnp.float32
    )

    # Reference: XLA strided conv (same semantics as the PyTorch module).
    ref = jax.lax.conv_general_dilated(
        x, weight, window_strides=(scale, scale), padding="VALID",
        dimension_numbers=("NCHW", "OIHW", "NCHW"),
    )
    ref = np.asarray(jax.block_until_ready(ref))

    # 1) f32 operands: must match the conv reference tightly.
    out_f32 = jax.block_until_ready(
        downsample_pallas(x, weight, scale, compute_dtype=jnp.float32)
    )
    assert out_f32.shape == (batch, n_feat, h // scale, w // scale)
    assert np.allclose(np.asarray(out_f32), ref, atol=1e-4, rtol=1e-4)

    # 2) default bf16 operands (f32 accumulation): compare against a reference
    #    computed on bf16-rounded inputs so the check stays tight.
    x_q = x.astype(jnp.bfloat16).astype(jnp.float32)
    w_q = weight.astype(jnp.bfloat16).astype(jnp.float32)
    ref_bf16 = jax.lax.conv_general_dilated(
        x_q, w_q, window_strides=(scale, scale), padding="VALID",
        dimension_numbers=("NCHW", "OIHW", "NCHW"),
    )
    ref_bf16 = np.asarray(jax.block_until_ready(ref_bf16))
    out_bf16 = jax.block_until_ready(downsample_pallas(x, weight, scale))
    assert out_bf16.shape == (batch, n_feat, h // scale, w // scale)
    assert np.allclose(np.asarray(out_bf16), ref_bf16, atol=1e-3, rtol=1e-3)

    print("KERNEL_OK")
</pallas_src>

<mosaic_0001>
module attributes {stable_mosaic.version = 11 : i64} {
  func.func @_patch_matmul_kernel(%arg0: i32, %arg1: memref<128x16xf32, #tpu.memory_space<vmem>>, %arg2: memref<16x128xf32, #tpu.memory_space<vmem>>, %arg3: memref<128x128xf32, #tpu.memory_space<vmem>>) attributes {dimension_semantics = [#tpu.dimension_semantics<parallel>], iteration_bounds = array<i64: 1>, scalar_prefetch = 0 : i64, scratch_operands = 0 : i64, tpu.core_type = #tpu.core_type<tc>, window_params = [{transform_indices = @transform_0, window_bounds = array<i64: 128, 16>}, {pipeline_mode = #tpu.pipeline_mode<synchronous>, transform_indices = @transform_1, window_bounds = array<i64: 16, 128>}, {transform_indices = @transform_2, window_bounds = array<i64: 128, 128>}]} {
    %c0 = arith.constant 0 : index
    %c0_0 = arith.constant 0 : index
    %0 = vector.load %arg1[%c0, %c0_0] : memref<128x16xf32, #tpu.memory_space<vmem>>, vector<128x16xf32>
    %c0_1 = arith.constant 0 : index
    %c0_2 = arith.constant 0 : index
    %1 = vector.load %arg2[%c0_1, %c0_2] : memref<16x128xf32, #tpu.memory_space<vmem>>, vector<16x128xf32>
    %cst = arith.constant dense<0.000000e+00> : vector<128x128xf32>
    %2 = tpu.matmul %0, %1, %cst {dimension_numbers = #tpu.dot_dimension_numbers<[1], [0], [0], [1], [0, 0, 1, 1], [], []>} : vector<128x16xf32>, vector<16x128xf32>, vector<128x128xf32> -> vector<128x128xf32>
    %c0_3 = arith.constant 0 : index
    %c0_4 = arith.constant 0 : index
    %3 = vector.load %arg3[%c0_3, %c0_4] : memref<128x128xf32, #tpu.memory_space<vmem>>, vector<128x128xf32>
    tpu.vector_store %arg3[%c0_3, %c0_4], %2 {strides = array<i32>} : memref<128x128xf32, #tpu.memory_space<vmem>>, vector<128x128xf32>,
    return
  }
  func.func @transform_0(%arg0: i32) -> (i32, i32) {
    %c0_i32 = arith.constant 0 : i32
    %c0_i32_0 = arith.constant 0 : i32
    return %arg0, %c0_i32 : i32, i32
  }
  func.func @transform_1(%arg0: i32) -> (i32, i32) {
    %c0_i32 = arith.constant 0 : i32
    %c0_i32_0 = arith.constant 0 : i32
    %c0_i32_1 = arith.constant 0 : i32
    return %c0_i32, %c0_i32_0 : i32, i32
  }
  func.func @transform_2(%arg0: i32) -> (i32, i32) {
    %c0_i32 = arith.constant 0 : i32
    %c0_i32_0 = arith.constant 0 : i32
    return %arg0, %c0_i32 : i32, i32
  }
}

</mosaic_0001>

<llo_original>
// kernel: tpu_custom_call.1
$region0: #{tpu_custom_call.1}
  #allocation0 [shape = 'u32[]', space=smem, size = 0x4, offset = 0x4, fixed_abs, tag = 'smem constant byte address 0x4 - core index']
  #allocation1 [shape = 'u32[144,128]{1,0:T(1,128)}', space=vmem, size = 0x12000, scoped, tag = 'internal scratch']
  %s0 = inlined_call_operand.vmem [shape: f32[128,16], index: 0, kind: input, shape index: {}]
  %s1 = inlined_call_operand.vmem [shape: f32[16,128], index: 1, kind: input, shape index: {}]
  %s2 = inlined_call_operand.hbm [shape: f32[128,128], index: 2, kind: output, shape index: {}]
  %s3 = sld [smem:[#allocation0]]
  $region18: #{tpu_custom_call.1} parent=0
    _
  %s5 = ssub.s32 1, %s3
  %s6 = scalar_select 0, %s5, %s3
  $region1: #{tpu_custom_call.1} parent=0
    #allocation2 [shape = 'u8[65536]{0}', space=vmem, size = 0x10000, scoped, tag = 'output window, operand 0, single buffered']
    #allocation3 [shape = 's32[1]{0}', space=sflag, size = 0x4, scoped, tag = 'scoped memory for tpu_custom_call.1']
    %7 = vsyncpa [#allocation3], 0
    // Predicated region
    $region2: #{tpu_custom_call.1} parent=1 // pred_check
      _
    $region3: #{tpu_custom_call.1} parent=1 // pred_check_branch
      %9 = sbr.rel (0) target = $region5
    $region4: #{tpu_custom_call.1} parent=1 // pred_region
      _
    $region5: #{tpu_custom_call.1} parent=1 // pred_fallthru
      _
    // Predicated region
    $region6: #{tpu_custom_call.1} parent=1 // pred_check
      _
    $region7: #{tpu_custom_call.1} parent=1 // pred_check_branch
      %11 = sbr.rel (0) target = $region9
    $region8: #{tpu_custom_call.1} parent=1 // pred_region
      _
    $region9: #{tpu_custom_call.1} parent=1 // pred_fallthru
      _
    %v12 = vld [vmem:[%s0] sm:$0xff]
    %v13 = vld [vmem:[%s0 + $0x8] sm:$0xff]
    %v14 = vld [vmem:[%s0 + $0x10] sm:$0xff]
    %v15 = vld [vmem:[%s0 + $0x18] sm:$0xff]
    %v16 = vld [vmem:[%s0 + $0x20] sm:$0xff]
    %v17 = vld [vmem:[%s0 + $0x28] sm:$0xff]
    %v18 = vld [vmem:[%s0 + $0x30] sm:$0xff]
    %v19 = vld [vmem:[%s0 + $0x38] sm:$0xff]
    %v20 = vld [vmem:[%s0 + $0x40] sm:$0xff]
    %v21 = vld [vmem:[%s0 + $0x48] sm:$0xff]
    %v22 = vld [vmem:[%s0 + $0x50] sm:$0xff]
    %v23 = vld [vmem:[%s0 + $0x58] sm:$0xff]
    %v24 = vld [vmem:[%s0 + $0x60] sm:$0xff]
    %v25 = vld [vmem:[%s0 + $0x68] sm:$0xff]
    %v26 = vld [vmem:[%s0 + $0x70] sm:$0xff]
    %v27 = vld [vmem:[%s0 + $0x78] sm:$0xff]
    %v28 = vld [vmem:[%s1] sm:$0xff]
    %v29 = vld [vmem:[%s1 + $0x8] sm:$0xff]
    %vm30 = vcmask 130048
    %v32 = vsel %vm30, %v12, 0
    %v35 = vsel %vm30, %v13, 0
    %v38 = vsel %vm30, %v14, 0
    %v41 = vsel %vm30, %v15, 0
    %v44 = vsel %vm30, %v16, 0
    %v47 = vsel %vm30, %v17, 0
    %v50 = vsel %vm30, %v18, 0
    %v53 = vsel %vm30, %v19, 0
    %v56 = vsel %vm30, %v20, 0
    %v59 = vsel %vm30, %v21, 0
    %v62 = vsel %vm30, %v22, 0
    %v65 = vsel %vm30, %v23, 0
    %v68 = vsel %vm30, %v24, 0
    %v71 = vsel %vm30, %v25, 0
    %v74 = vsel %vm30, %v26, 0
    %v77 = vsel %vm30, %v27, 0
    %79 = vmatprep.subr.mxu0 0.0
    %80 = vmatpush1.msra.mxu0 %v28
    %81 = vmatprep.subr.mxu0 0.0
    %82 = vmatpush1.msra.mxu0 %v29
    %83 = vmatprep.subr.mxu0 0.0
    %84 = vmatpush1.msra.mxu0 0.0
    %85 = vmatprep.subr.mxu0 0.0
    %86 = vmatpush1.msra.mxu0 0.0
    %87 = vmatprep.subr.mxu0 0.0
    %88 = vmatpush1.msra.mxu0 0.0
    %89 = vmatprep.subr.mxu0 0.0
    %90 = vmatpush1.msra.mxu0 0.0
    %91 = vmatprep.subr.mxu0 0.0
    %92 = vmatpush1.msra.mxu0 0.0
    %93 = vmatprep.subr.mxu0 0.0
    %94 = vmatpush1.msra.mxu0 0.0
    %95 = vmatprep.subr.mxu0 0.0
    %96 = vmatpush1.msra.mxu0 0.0
    %97 = vmatprep.subr.mxu0 0.0
    %98 = vmatpush1.msra.mxu0 0.0
    %99 = vmatprep.subr.mxu0 0.0
    %100 = vmatpush1.msra.mxu0 0.0
    %101 = vmatprep.subr.mxu0 0.0
    %102 = vmatpush1.msra.mxu0 0.0
    %103 = vmatprep.subr.mxu0 0.0
    %104 = vmatpush1.msra.mxu0 0.0
    %105 = vmatprep.subr.mxu0 0.0
    %106 = vmatpush1.msra.mxu0 0.0
    %107 = vmatprep.subr.mxu0 0.0
    %108 = vmatpush1.msra.mxu0 0.0
    %109 = vmatprep.subr.mxu0 0.0
    %110 = vmatpush1.msra.mxu0 0.0
    %111 = vmatprep.subr.mxu0 0.0
    %112 = vmatpush1.msra.mxu0 0.0
    %113 = vmatprep.subr.mxu0 0.0
    %114 = vmatpush1.msra.mxu0 0.0
    %115 = vmatprep.subr.mxu0 0.0
    %116 = vmatpush1.msra.mxu0 0.0
    %117 = vmatprep.subr.mxu0 0.0
    %118 = vmatpush1.msra.mxu0 0.0
    %119 = vmatprep.subr.mxu0 0.0
    %120 = vmatpush1.msra.mxu0 0.0
    %121 = vmatprep.subr.mxu0 0.0
    %122 = vmatpush1.msra.mxu0 0.0
    %123 = vmatprep.subr.mxu0 0.0
    %124 = vmatpush1.msra.mxu0 0.0
    %125 = vmatprep.subr.mxu0 0.0
    %126 = vmatpush1.msra.mxu0 0.0
    %127 = vmatprep.subr.mxu0 0.0
    %128 = vmatpush1.msra.mxu0 0.0
    %129 = vmatprep.subr.mxu0 0.0
    %130 = vmatpush1.msra.mxu0 0.0
    %131 = vmatprep.subr.mxu0 0.0
    %132 = vmatpush1.msra.mxu0 0.0
    %133 = vmatprep.subr.mxu0 0.0
    %134 = vmatpush1.msra.mxu0 0.0
    %135 = vmatprep.subr.mxu0 0.0
    %136 = vmatpush1.msra.mxu0 0.0
    %137 = vmatprep.subr.mxu0 0.0
    %138 = vmatpush1.msra.mxu0 0.0
    %139 = vmatprep.subr.mxu0 0.0
    %140 = vmatpush1.msra.mxu0 0.0
    %141 = vmatprep.subr.mxu0 0.0
    %142 = vmatpush1.msra.mxu0 0.0
    %143 = vmatprep.mubr.f32.mxu0 0.0
    %144 = vmatmul.mubr.f32.gmra.mrb[0].mxu0 %v32
    %v145 = vpop.f32.mrb[0].mxu0
    %v146 = vadd.f32 0.0, %v145
    %v147 = vpop.f32.mrb[0].mxu0
    %148 = vmatprep.mubr.f32.mxu0 0.0
    %149 = vmatmul.mubr.f32.gmra.mrb[0].mxu0 %v35
    %v150 = vpop.f32.mrb[0].mxu0
    %v151 = vadd.f32 0.0, %v150
    %v152 = vpop.f32.mrb[0].mxu0
    %153 = vmatprep.mubr.f32.mxu0 0.0
    %154 = vmatmul.mubr.f32.gmra.mrb[0].mxu0 %v38
    %v155 = vpop.f32.mrb[0].mxu0
    %v156 = vadd.f32 0.0, %v155
    %v157 = vpop.f32.mrb[0].mxu0
    %158 = vmatprep.mubr.f32.mxu0 0.0
    %159 = vmatmul.mubr.f32.gmra.mrb[0].mxu0 %v41
    %v160 = vpop.f32.mrb[0].mxu0
    %v161 = vadd.f32 0.0, %v160
    %v162 = vpop.f32.mrb[0].mxu0
    %163 = vmatprep.mubr.f32.mxu0 0.0
    %164 = vmatmul.mubr.f32.gmra.mrb[0].mxu0 %v44
    %v165 = vpop.f32.mrb[0].mxu0
    %v166 = vadd.f32 0.0, %v165
    %v167 = vpop.f32.mrb[0].mxu0
    %168 = vmatprep.mubr.f32.mxu0 0.0
    %169 = vmatmul.mubr.f32.gmra.mrb[0].mxu0 %v47
    %v170 = vpop.f32.mrb[0].mxu0
    %v171 = vadd.f32 0.0, %v170
    %v172 = vpop.f32.mrb[0].mxu0
    %173 = vmatprep.mubr.f32.mxu0 0.0
    %174 = vmatmul.mubr.f32.gmra.mrb[0].mxu0 %v50
    %v175 = vpop.f32.mrb[0].mxu0
    %v176 = vadd.f32 0.0, %v175
    %v177 = vpop.f32.mrb[0].mxu0
    %178 = vmatprep.mubr.f32.mxu0 0.0
    %179 = vmatmul.mubr.f32.gmra.mrb[0].mxu0 %v53
    %v180 = vpop.f32.mrb[0].mxu0
    %v181 = vadd.f32 0.0, %v180
    %v182 = vpop.f32.mrb[0].mxu0
    %183 = vmatprep.mubr.f32.mxu0 0.0
    %184 = vmatmul.mubr.f32.gmra.mrb[0].mxu0 %v56
    %v185 = vpop.f32.mrb[0].mxu0
    %v186 = vadd.f32 0.0, %v185
    %v187 = vpop.f32.mrb[0].mxu0
    %188 = vmatprep.mubr.f32.mxu0 0.0
    %189 = vmatmul.mubr.f32.gmra.mrb[0].mxu0 %v59
    %v190 = vpop.f32.mrb[0].mxu0
    %v191 = vadd.f32 0.0, %v190
    %v192 = vpop.f32.mrb[0].mxu0
    %193 = vmatprep.mubr.f32.mxu0 0.0
    %194 = vmatmul.mubr.f32.gmra.mrb[0].mxu0 %v62
    %v195 = vpop.f32.mrb[0].mxu0
    %v196 = vadd.f32 0.0, %v195
    %v197 = vpop.f32.mrb[0].mxu0
    %198 = vmatprep.mubr.f32.mxu0 0.0
    %199 = vmatmul.mubr.f32.gmra.mrb[0].mxu0 %v65
    %v200 = vpop.f32.mrb[0].mxu0
    %v201 = vadd.f32 0.0, %v200
    %v202 = vpop.f32.mrb[0].mxu0
    %203 = vmatprep.mubr.f32.mxu0 0.0
    %204 = vmatmul.mubr.f32.gmra.mrb[0].mxu0 %v68
    %v205 = vpop.f32.mrb[0].mxu0
    %v206 = vadd.f32 0.0, %v205
    %v207 = vpop.f32.mrb[0].mxu0
    %208 = vmatprep.mubr.f32.mxu0 0.0
    %209 = vmatmul.mubr.f32.gmra.mrb[0].mxu0 %v71
    %v210 = vpop.f32.mrb[0].mxu0
    %v211 = vadd.f32 0.0, %v210
    %v212 = vpop.f32.mrb[0].mxu0
    %213 = vmatprep.mubr.f32.mxu0 0.0
    %214 = vmatmul.mubr.f32.gmra.mrb[0].mxu0 %v74
    %v215 = vpop.f32.mrb[0].mxu0
    %v216 = vadd.f32 0.0, %v215
    %v217 = vpop.f32.mrb[0].mxu0
    %218 = vmatprep.mubr.f32.mxu0 0.0
    %219 = vmatmul.mubr.f32.gmra.mrb[0].mxu0 %v77
    %v220 = vpop.f32.mrb[0].mxu0
    %v221 = vadd.f32 0.0, %v220
    %v222 = vpop.f32.mrb[0].mxu0
    %223 = vdwg.mxu0
    %224 = vst [vmem:[#allocation2] sm:$0xff] %v146
    %225 = vst [vmem:[#allocation2 + $0x8] sm:$0xff] %v151
    %226 = vst [vmem:[#allocation2 + $0x10] sm:$0xff] %v156
    %227 = vst [vmem:[#allocation2 + $0x18] sm:$0xff] %v161
    %228 = vst [vmem:[#allocation2 + $0x20] sm:$0xff] %v166
    %229 = vst [vmem:[#allocation2 + $0x28] sm:$0xff] %v171
    %230 = vst [vmem:[#allocation2 + $0x30] sm:$0xff] %v176
    %231 = vst [vmem:[#allocation2 + $0x38] sm:$0xff] %v181
    %232 = vst [vmem:[#allocation2 + $0x40] sm:$0xff] %v186
    %233 = vst [vmem:[#allocation2 + $0x48] sm:$0xff] %v191
    %234 = vst [vmem:[#allocation2 + $0x50] sm:$0xff] %v196
    %235 = vst [vmem:[#allocation2 + $0x58] sm:$0xff] %v201
    %236 = vst [vmem:[#allocation2 + $0x60] sm:$0xff] %v206
    %237 = vst [vmem:[#allocation2 + $0x68] sm:$0xff] %v211
    %238 = vst [vmem:[#allocation2 + $0x70] sm:$0xff] %v216
    %239 = vst [vmem:[#allocation2 + $0x78] sm:$0xff] %v221
    // Predicated region
    $region10: #{tpu_custom_call.1} parent=1 // pred_check
      _
    $region11: #{tpu_custom_call.1} parent=1 // pred_check_branch
      %241 = sbr.rel (0) target = $region13
    $region12: #{tpu_custom_call.1} parent=1 // pred_region
      %s243 = ssub.s32 2048, 2048
      %244 = vsyncadd [#allocation3], %s243
      %s245 = sshll.u32 [#allocation2], 4
      %s246 = int_to_ptr.vmem [resolvable:$true] %s245
      %251 = dma.vmem_to_hbm [thread:$0]  %s246, 2048, %s2, [#allocation3], 128, 128, 8
    $region13: #{tpu_custom_call.1} parent=1 // pred_fallthru
      _
    // Predicated region
    $region14: #{tpu_custom_call.1} parent=1 // pred_check
      _
    $region15: #{tpu_custom_call.1} parent=1 // pred_check_branch
      %253 = sbr.rel (0) target = $region17
    $region16: #{tpu_custom_call.1} parent=1 // pred_region
      %254 = dma.done [#allocation3], 2048
    $region17: #{tpu_custom_call.1} parent=1 // pred_fallthru
      _
    %255 = vsyncpa [#allocation3], 1

</llo_original>
